<compile_context>
chip_gen: v7x
topology: tpu7x:2x2x1
jax: 0.10.0
libtpu: 0.0.40
codegen_flags: <defaults>
</compile_context>

<pallas_src>
import jax
import jax.numpy as jnp
from jax.experimental import pallas as pl
from jax.experimental.pallas import tpu as pltpu


def _ce_kernel(logit_ref, tgt_ref, loss_ref, valid_ref):
    # (T, C) logits for this row tile; compute in f32 regardless of HBM dtype.
    x = logit_ref[...].astype(jnp.float32)
    t = tgt_ref[...]                                           # (T, 1) int32

    # Numerically-stable log-sum-exp per row.
    m = jnp.max(x, axis=-1, keepdims=True)                     # (T, 1)
    lse = jnp.log(jnp.sum(jnp.exp(x - m), axis=-1, keepdims=True)) + m

    # Gather logit at the target class via iota==target mask (VPU-friendly,
    # no dynamic gather).  Out-of-range targets silently yield 0 (documented).
    col = jax.lax.broadcasted_iota(jnp.int32, x.shape, 1)      # (T, C)
    tgt_logit = jnp.sum(jnp.where(col == t, x, 0.0), axis=-1, keepdims=True)

    valid = t != -1                                            # (T, 1) bool
    loss_ref[...] = jnp.where(valid, lse - tgt_logit, 0.0)
    valid_ref[...] = valid.astype(jnp.float32)


def _choose_row_tile(n_rows, n_classes):
    """Row tile sized by a VMEM byte budget, multiple of 16, capped by N."""
    c_lanes = max(128, ((n_classes + 127) // 128) * 128)       # lane padding
    budget_bytes = 4 * 1024 * 1024                             # per f32 logit block
    tile = budget_bytes // (c_lanes * 4)
    tile = max(16, min(int(tile), 2048))
    n_rounded = ((n_rows + 15) // 16) * 16
    tile = min(tile, n_rounded)
    tile = max(16, (tile // 16) * 16)
    return int(tile)


def cross_entropy_loss(logit, target_seq):
    """Matches nn.CrossEntropyLoss(ignore_index=-1) on flattened inputs."""
    C = logit.shape[-1]
    logit2d = logit.reshape(-1, C)
    tgt2d = target_seq.reshape(-1, 1).astype(jnp.int32)
    N = logit2d.shape[0]

    itemsize = jnp.dtype(logit2d.dtype).itemsize
    tile = _choose_row_tile(N, C)
    n_pad = ((N + tile - 1) // tile) * tile
    if n_pad != N:
        # Padded rows get target=-1 -> contribute 0 to sum and count.
        logit2d = jnp.pad(logit2d, ((0, n_pad - N), (0, 0)))
        tgt2d = jnp.pad(tgt2d, ((0, n_pad - N), (0, 0)), constant_values=-1)

    grid = (n_pad // tile,)

    cost = pl.CostEstimate(
        flops=5 * n_pad * C,                    # max/sub/exp-adds/mask/sum
        transcendentals=n_pad * C + n_pad,      # exp per element + log per row
        bytes_accessed=n_pad * C * itemsize + n_pad * 4 + 2 * n_pad * 4,
    )

    per_row_loss, per_row_valid = pl.pallas_call(
        _ce_kernel,
        out_shape=(
            jax.ShapeDtypeStruct((n_pad, 1), jnp.float32),
            jax.ShapeDtypeStruct((n_pad, 1), jnp.float32),
        ),
        grid_spec=pltpu.PrefetchScalarGridSpec(
            num_scalar_prefetch=0,
            grid=grid,
            in_specs=[
                pl.BlockSpec((tile, C), lambda i: (i, 0)),
                pl.BlockSpec((tile, 1), lambda i: (i, 0)),
            ],
            out_specs=[
                pl.BlockSpec((tile, 1), lambda i: (i, 0)),
                pl.BlockSpec((tile, 1), lambda i: (i, 0)),
            ],
        ),
        compiler_params=pltpu.CompilerParams(
            # Disjoint output rows per step -> fully parallel (v7x 2-TC shard).
            dimension_semantics=("parallel",),
            vmem_limit_bytes=32 * 1024 * 1024,
        ),
        cost_estimate=cost,
    )(logit2d, tgt2d)

    total = jnp.sum(per_row_loss)               # tree-reduced in XLA
    count = jnp.sum(per_row_valid)
    return total / count                        # nan if no valid rows (like PyTorch)


def cross_entropy_module(logit, target_seq):
    """Mirror of CrossEntropy.forward: returns (loss, dict).

    The dict holds the device scalar (no blocking host float() conversion).
    """
    loss = cross_entropy_loss(logit, target_seq)
    return loss, {"CrossEntropy Loss": loss}


def _reference(logit, target_seq):
    C = logit.shape[-1]
    x = logit.reshape(-1, C).astype(jnp.float32)
    t = target_seq.reshape(-1)
    valid = t != -1
    t_safe = jnp.where(valid, t, 0)
    logp = jax.nn.log_softmax(x, axis=-1)
    nll = -jnp.take_along_axis(logp, t_safe[:, None], axis=-1)[:, 0]
    nll = jnp.where(valid, nll, 0.0)
    return jnp.sum(nll) / jnp.sum(valid.astype(jnp.float32))


if __name__ == "__main__":
    key = jax.random.PRNGKey(0)
    k1, k2, k3, k4, k5, k6 = jax.random.split(key, 6)

    # --- case 1: f32 logits, B=2, S=8, C=32 (N=16 rows) ---
    B, S, C = 2, 8, 32
    logit = jax.random.normal(k1, (B, S, C), dtype=jnp.float32)
    target = jax.random.randint(k2, (B, S), 0, C, dtype=jnp.int32)
    ignore_mask = jax.random.bernoulli(k3, 0.25, (B, S))
    target = jnp.where(ignore_mask, -1, target)

    loss, info = cross_entropy_module(logit, target)
    jax.block_until_ready(loss)
    ref = _reference(logit, target)
    assert jnp.allclose(loss, ref, rtol=1e-5, atol=1e-5), (loss, ref)

    # --- case 2: row count not a multiple of the tile (exercises padding) ---
    B2, S2, C2 = 3, 5, 48
    logit2 = jax.random.normal(k4, (B2, S2, C2), dtype=jnp.float32)
    target2 = jax.random.randint(k5, (B2, S2), 0, C2, dtype=jnp.int32)
    loss2 = cross_entropy_loss(logit2, target2)
    jax.block_until_ready(loss2)
    ref2 = _reference(logit2, target2)
    assert jnp.allclose(loss2, ref2, rtol=1e-5, atol=1e-5), (loss2, ref2)

    # --- case 3: bf16 logits in HBM, f32 math inside the kernel ---
    logit3 = jax.random.normal(k6, (B, S, C), dtype=jnp.float32).astype(jnp.bfloat16)
    loss3 = cross_entropy_loss(logit3, target)
    jax.block_until_ready(loss3)
    ref3 = _reference(logit3.astype(jnp.float32), target)
    assert jnp.allclose(loss3, ref3, rtol=1e-3, atol=1e-3), (loss3, ref3)

    print("KERNEL_OK")
</pallas_src>

<mosaic_0001>
module attributes {stable_mosaic.version = 11 : i64} {
  func.func @_ce_kernel(%arg0: i32, %arg1: memref<16x32xf32, #tpu.memory_space<vmem>>, %arg2: memref<16x1xi32, #tpu.memory_space<vmem>>, %arg3: memref<16x1xf32, #tpu.memory_space<vmem>>, %arg4: memref<16x1xf32, #tpu.memory_space<vmem>>) attributes {dimension_semantics = [#tpu.dimension_semantics<parallel>], iteration_bounds = array<i64: 1>, scalar_prefetch = 0 : i64, scratch_operands = 0 : i64, tpu.core_type = #tpu.core_type<tc>, window_params = [{transform_indices = @transform_0, window_bounds = array<i64: 16, 32>}, {transform_indices = @transform_1, window_bounds = array<i64: 16, 1>}, {transform_indices = @transform_2, window_bounds = array<i64: 16, 1>}, {transform_indices = @transform_3, window_bounds = array<i64: 16, 1>}]} {
    %c0 = arith.constant 0 : index
    %c0_0 = arith.constant 0 : index
    %0 = vector.load %arg1[%c0, %c0_0] : memref<16x32xf32, #tpu.memory_space<vmem>>, vector<16x32xf32>
    %c0_1 = arith.constant 0 : index
    %c0_2 = arith.constant 0 : index
    %1 = vector.load %arg2[%c0_1, %c0_2] : memref<16x1xi32, #tpu.memory_space<vmem>>, vector<16x1xi32>
    %cst = arith.constant dense<0xFF800000> : vector<16xf32>
    %2 = vector.multi_reduction <maximumf>, %0, %cst [1] : vector<16x32xf32> to vector<16xf32>
    %3 = vector.shape_cast %2 : vector<16xf32> to vector<16x1xf32>
    %4 = vector.broadcast %3 : vector<16x1xf32> to vector<16x32xf32>
    %5 = arith.subf %0, %4 : vector<16x32xf32>
    %6 = math.exp %5 : vector<16x32xf32>
    %cst_3 = arith.constant dense<0.000000e+00> : vector<16xf32>
    %7 = vector.multi_reduction <add>, %6, %cst_3 [1] : vector<16x32xf32> to vector<16xf32>
    %8 = vector.shape_cast %7 : vector<16xf32> to vector<16x1xf32>
    %9 = math.log %8 : vector<16x1xf32>
    %10 = arith.addf %9, %3 : vector<16x1xf32>
    %11 = tpu.iota {dimensions = array<i32: 1>} : vector<16x32xi32>
    %12 = vector.broadcast %1 : vector<16x1xi32> to vector<16x32xi32>
    %13 = arith.cmpi eq, %11, %12 : vector<16x32xi32>
    %cst_4 = arith.constant 0.000000e+00 : f32
    %14 = vector.broadcast %cst_4 : f32 to vector<16x32xf32>
    %15 = arith.select %13, %0, %14 : vector<16x32xi1>, vector<16x32xf32>
    %cst_5 = arith.constant dense<0.000000e+00> : vector<16xf32>
    %16 = vector.multi_reduction <add>, %15, %cst_5 [1] : vector<16x32xf32> to vector<16xf32>
    %17 = vector.shape_cast %16 : vector<16xf32> to vector<16x1xf32>
    %c-1_i32 = arith.constant -1 : i32
    %18 = vector.broadcast %c-1_i32 : i32 to vector<16x1xi32>
    %19 = arith.cmpi ne, %1, %18 : vector<16x1xi32>
    %20 = arith.subf %10, %17 : vector<16x1xf32>
    %cst_6 = arith.constant 0.000000e+00 : f32
    %21 = vector.broadcast %cst_6 : f32 to vector<16x1xf32>
    %22 = arith.select %19, %20, %21 : vector<16x1xi1>, vector<16x1xf32>
    %c0_7 = arith.constant 0 : index
    %c0_8 = arith.constant 0 : index
    %23 = vector.load %arg3[%c0_7, %c0_8] : memref<16x1xf32, #tpu.memory_space<vmem>>, vector<16x1xf32>
    tpu.vector_store %arg3[%c0_7, %c0_8], %22 {strides = array<i32>} : memref<16x1xf32, #tpu.memory_space<vmem>>, vector<16x1xf32>,
    %24 = arith.extui %19 : vector<16x1xi1> to vector<16x1xi32>
    %25 = arith.sitofp %24 : vector<16x1xi32> to vector<16x1xf32>
    %c0_9 = arith.constant 0 : index
    %c0_10 = arith.constant 0 : index
    %26 = vector.load %arg4[%c0_9, %c0_10] : memref<16x1xf32, #tpu.memory_space<vmem>>, vector<16x1xf32>
    tpu.vector_store %arg4[%c0_9, %c0_10], %25 {strides = array<i32>} : memref<16x1xf32, #tpu.memory_space<vmem>>, vector<16x1xf32>,
    return
  }
  func.func @transform_0(%arg0: i32) -> (i32, i32) {
    %c0_i32 = arith.constant 0 : i32
    %c0_i32_0 = arith.constant 0 : i32
    return %arg0, %c0_i32 : i32, i32
  }
  func.func @transform_1(%arg0: i32) -> (i32, i32) {
    %c0_i32 = arith.constant 0 : i32
    %c0_i32_0 = arith.constant 0 : i32
    return %arg0, %c0_i32 : i32, i32
  }
  func.func @transform_2(%arg0: i32) -> (i32, i32) {
    %c0_i32 = arith.constant 0 : i32
    %c0_i32_0 = arith.constant 0 : i32
    return %arg0, %c0_i32 : i32, i32
  }
  func.func @transform_3(%arg0: i32) -> (i32, i32) {
    %c0_i32 = arith.constant 0 : i32
    %c0_i32_0 = arith.constant 0 : i32
    return %arg0, %c0_i32 : i32, i32
  }
}

</mosaic_0001>

<llo_original>
// kernel: tpu_custom_call.1
$region0: #{tpu_custom_call.1}
  #allocation0 [shape = 'u32[]', space=smem, size = 0x4, offset = 0x4, fixed_abs, tag = 'smem constant byte address 0x4 - core index']
  #allocation1 [shape = 'u32[144,128]{1,0:T(1,128)}', space=vmem, size = 0x12000, scoped, tag = 'internal scratch']
  %s0 = inlined_call_operand.vmem [shape: f32[16,32], index: 0, kind: input, shape index: {}]
  %s1 = inlined_call_operand.vmem [shape: s32[16,1], index: 1, kind: input, shape index: {}]
  %s2 = inlined_call_operand.vmem [shape: f32[16,1], index: 2, kind: output, shape index: {0}]
  %s3 = inlined_call_operand.vmem [shape: f32[16,1], index: 3, kind: output, shape index: {1}]
  %4 = xla_tuple %s2, %s3
  %s5 = sld [smem:[#allocation0]]
  $region26: #{tpu_custom_call.1} parent=0
    _
  %s7 = ssub.s32 1, %s5
  %s8 = scalar_select 0, %s7, %s5
  // Predicated region
  $region2: #{tpu_custom_call.1} parent=0 // pred_check
    _
  $region3: #{tpu_custom_call.1} parent=0 // pred_check_branch
    %10 = sbr.rel (0) target = $region5
  $region4: #{tpu_custom_call.1} parent=0 // pred_region
    _
  $region5: #{tpu_custom_call.1} parent=0 // pred_fallthru
    _
  // Predicated region
  $region6: #{tpu_custom_call.1} parent=0 // pred_check
    _
  $region7: #{tpu_custom_call.1} parent=0 // pred_check_branch
    %12 = sbr.rel (0) target = $region9
  $region8: #{tpu_custom_call.1} parent=0 // pred_region
    _
  $region9: #{tpu_custom_call.1} parent=0 // pred_fallthru
    _
  %v13 = vld [vmem:[%s0] sm:$0xff]
  %v14 = vld [vmem:[%s0 + $0x8] sm:$0xff]
  %v15 = vld [vmem:[%s1] sm:$0xff]
  %v16 = vld [vmem:[%s1 + $0x8] sm:$0xff]
  %vm17 = vcmask 261120
  %v18 = vsel %vm17, %v13, -inf
  %19 = vmax.xlane.f32.xlu0 %v18
  %v20 = vpop.xlane.xlu0 %19
  %v21 = vsel %vm17, %v14, -inf
  %22 = vmax.xlane.f32.xlu0 %v21
  %v23 = vpop.xlane.xlu0 %22
  %v24 = vsub.f32 %v13, %v20
  %v25 = vsub.f32 %v14, %v23
  %v26 = vmul.f32 %v24, 1.442695
  %v27 = vpow.pop %v26
  %v28 = vmul.f32 %v25, 1.442695
  %v29 = vpow.pop %v28
  %v30 = vsel %vm17, %v27, 0.0
  %31 = vadd.xlane.f32.xlu0 %v30
  %v32 = vpop.xlane.xlu0 %31
  %v33 = vsel %vm17, %v29, 0.0
  %34 = vadd.xlane.f32.xlu0 %v33
  %v35 = vpop.xlane.xlu0 %34
  %v36 = vlog2.pop %v32
  %v37 = vmul.f32 %v36, 0.6931472
  %v38 = vlog2.pop %v35
  %v39 = vmul.f32 %v38, 0.6931472
  %v40 = vadd.f32 %v37, %v20
  %v41 = vadd.f32 %v39, %v23
  %v42 = vlaneseq
  %v43 = vand.u32 %v42, 127
  %44 = vset.pattern.permute.xlu0 0
  %45 = vperm.xlu0 %44, %v15
  %v46 = vpop.permute.xlu0 %45
  %47 = vset.pattern.permute.xlu0 0
  %48 = vperm.xlu0 %47, %v16
  %v49 = vpop.permute.xlu0 %48
  %vm50 = vcmp.eq.s32.totalorder %v43, %v46
  %vm51 = vcmp.eq.s32.totalorder %v43, %v49
  %v52 = vsel %vm50, %v13, 0.0
  %v53 = vsel %vm51, %v14, 0.0
  %v54 = vsel %vm17, %v52, 0.0
  %55 = vadd.xlane.f32.xlu0 %v54
  %v56 = vpop.xlane.xlu0 %55
  %v57 = vsel %vm17, %v53, 0.0
  %58 = vadd.xlane.f32.xlu0 %v57
  %v59 = vpop.xlane.xlu0 %58
  %vm60 = vcmp.ne.s32.totalorder %v15, 4294967295
  %vm61 = vcmp.ne.s32.totalorder %v16, 4294967295
  %v62 = vsub.f32 %v40, %v56
  %v63 = vsub.f32 %v41, %v59
  %v64 = vsel %vm60, %v62, 0.0
  %v65 = vsel %vm61, %v63, 0.0
  %vm66 = vcmask 7168
  %67 = vst.msk [vmem:[%s2] sm:$0xff] %vm66, %v64
  %68 = vst.msk [vmem:[%s2 + $0x8] sm:$0xff] %vm66, %v65
  %v69 = vsel %vm60, 1, 0
  %v70 = vsel %vm61, 1, 0
  %v71 = vcvt.s32.f32 %v69
  %v72 = vcvt.s32.f32 %v70
  %73 = vst.msk [vmem:[%s3] sm:$0xff] %vm66, %v71
  %74 = vst.msk [vmem:[%s3 + $0x8] sm:$0xff] %vm66, %v72
  // Predicated region
  $region10: #{tpu_custom_call.1} parent=0 // pred_check
    _
  $region11: #{tpu_custom_call.1} parent=0 // pred_check_branch
    %76 = sbr.rel (0) target = $region13
  $region12: #{tpu_custom_call.1} parent=0 // pred_region
    _
  $region13: #{tpu_custom_call.1} parent=0 // pred_fallthru
    _
  // Predicated region
  $region14: #{tpu_custom_call.1} parent=0 // pred_check
    _
  $region15: #{tpu_custom_call.1} parent=0 // pred_check_branch
    %78 = sbr.rel (0) target = $region17
  $region16: #{tpu_custom_call.1} parent=0 // pred_region
    _
  $region17: #{tpu_custom_call.1} parent=0 // pred_fallthru
    _
  // Predicated region
  $region18: #{tpu_custom_call.1} parent=0 // pred_check
    _
  $region19: #{tpu_custom_call.1} parent=0 // pred_check_branch
    %80 = sbr.rel (0) target = $region21
  $region20: #{tpu_custom_call.1} parent=0 // pred_region
    _
  $region21: #{tpu_custom_call.1} parent=0 // pred_fallthru
    _
  // Predicated region
  $region22: #{tpu_custom_call.1} parent=0 // pred_check
    _
  $region23: #{tpu_custom_call.1} parent=0 // pred_check_branch
    %82 = sbr.rel (0) target = $region25
  $region24: #{tpu_custom_call.1} parent=0 // pred_region
    _
  $region25: #{tpu_custom_call.1} parent=0 // pred_fallthru
    _

</llo_original>
